<compile_context>
chip_gen: v7x
topology: tpu7x:2x2x1
jax: 0.10.0
libtpu: 0.0.40
codegen_flags: <defaults>
</compile_context>

<pallas_src>
import functools

import jax
import jax.numpy as jnp
from jax.experimental import pallas as pl
from jax.experimental.pallas import tpu as pltpu


def _block_kernel(x_ref, gamma_ref, beta_ref,
                  w1_ref, b1_ref, w2_ref, b2_ref,
                  rho1_ref, rho2_ref, o_ref, *, eps, H, W):
    C = x_ref.shape[1]
    HW = x_ref.shape[2]

    x = x_ref[0].astype(jnp.float32)              # (C, HW), lane-dense
    gamma = gamma_ref[0].astype(jnp.float32)      # (C, 1)
    beta = beta_ref[0].astype(jnp.float32)        # (C, 1)
    rho1 = rho1_ref[...].astype(jnp.float32)      # (C, 1)
    rho2 = rho2_ref[...].astype(jnp.float32)      # (C, 1)
    b1 = b1_ref[...].astype(jnp.float32)          # (C, 1)
    b2 = b2_ref[...].astype(jnp.float32)          # (C, 1)

    # Flat-index boundary masks (computed once, reused by both convs).
    q = jax.lax.broadcasted_iota(jnp.int32, (1, HW), 1)
    col = q % W
    left = col == 0
    right = col == W - 1
    top = q < W
    bottom = q >= (H - 1) * W

    def conv3x3(y, w_ref):
        # ReflectionPad2d(1) + 3x3 conv (bias-free), expressed as rolls +
        # masked selects on the flat layout followed by a single
        # (C, 9C) x (9C, HW) MXU matmul.
        # pltpu.roll follows np.roll: roll(y, s)[p] == y[(p - s) % HW].
        up = pltpu.roll(y, HW - W, axis=1)        # up[p]   = y[p + W] (row below)
        down = pltpu.roll(y, W, axis=1)           # down[p] = y[p - W] (row above)
        rows = (jnp.where(top, up, down),         # dy = -1 (reflect at h == 0)
                y,                                # dy =  0
                jnp.where(bottom, down, up))      # dy = +1 (reflect at h == H-1)
        slabs = []
        for r in rows:
            nxt = pltpu.roll(r, HW - 1, axis=1)   # nxt[p] = r[p + 1]
            prv = pltpu.roll(r, 1, axis=1)        # prv[p] = r[p - 1]
            slabs.append(jnp.where(left, nxt, prv))   # dx = -1 (reflect at w == 0)
            slabs.append(r)                           # dx =  0
            slabs.append(jnp.where(right, prv, nxt))  # dx = +1 (reflect at w == W-1)
        patches = jnp.concatenate(slabs, axis=0)      # (9*C, HW)
        return jnp.dot(w_ref[...].astype(jnp.float32), patches,
                       preferred_element_type=jnp.float32)    # (C, HW)

    def ada_iln(z, rho, bias):
        # z is the bias-free conv output; y = z + bias is the torch conv
        # output that adaILN normalizes.  The per-channel bias cancels in the
        # centered residual, so instance-norm moments come straight from z and
        # the bias only enters the (C,1)-sized mean/shift terms.
        hw = z.shape[1]
        z_mean = jnp.sum(z, axis=1, keepdims=True) * (1.0 / hw)     # (C, 1)
        d = z - z_mean
        ss = jnp.sum(d * d, axis=1, keepdims=True)                  # (C, 1)
        a_in = jax.lax.rsqrt(ss * (1.0 / (hw - 1)) + eps)           # (C, 1)
        in_mean = z_mean + bias                                     # mean of y
        # Layer-norm stats derived from the per-channel moments (no second
        # full-tensor reduction).  torch.var default is unbiased (ddof=1).
        ln_mean = jnp.sum(in_mean) * (1.0 / C)                      # scalar
        dm = in_mean - ln_mean
        ln_ss = jnp.sum(ss) + hw * jnp.sum(dm * dm)
        a_ln = jax.lax.rsqrt(ln_ss * (1.0 / (C * hw - 1)) + eps)    # scalar
        # Fold rho-mix, gamma, beta AND the conv bias into one per-channel
        # scale/shift FMA over the full (C, HW) tensor.
        mix_scale = rho * a_in + (1.0 - rho) * a_ln                 # (C, 1)
        mix_shift = rho * a_in * in_mean + (1.0 - rho) * a_ln * ln_mean
        scale = gamma * mix_scale
        shift = beta - gamma * mix_shift + bias * scale
        return z * scale + shift

    h = conv3x3(x, w1_ref)
    h = ada_iln(h, rho1, b1)
    h = jnp.maximum(h, 0.0)                       # ReLU
    h = conv3x3(h, w2_ref)                        # stays in flat layout
    h = ada_iln(h, rho2, b2)
    o_ref[0] = (h + x).astype(o_ref.dtype)        # residual, lane-dense store


def resnet_adailn_block(x, gamma, beta, w1, b1, w2, b2, rho1, rho2, eps=1e-5):
    B, C, H, W = x.shape
    HW = H * W
    assert H >= 2 and W >= 2, "ReflectionPad2d(1) requires H, W >= 2"

    # Wrapper-side layout plumbing: lane-dense activations + im2col weights.
    x_flat = x.reshape(B, C, HW)
    # w_mat[o, (ky*3 + kx)*C + i] = w[o, i, ky, kx]
    w1_mat = jnp.transpose(w1, (0, 2, 3, 1)).reshape(C, 9 * C)
    w2_mat = jnp.transpose(w2, (0, 2, 3, 1)).reshape(C, 9 * C)
    gamma_c = gamma.reshape(B, C, 1)
    beta_c = beta.reshape(B, C, 1)
    b1_c = b1.reshape(C, 1)
    b2_c = b2.reshape(C, 1)
    rho1_c = rho1.reshape(C, 1)
    rho2_c = rho2.reshape(C, 1)

    kernel = functools.partial(_block_kernel, eps=eps, H=H, W=W)
    fixed = lambda shape: pl.BlockSpec(shape, lambda b: (0,) * len(shape))

    # Rough per-image VMEM working set (f32): double-buffered in/out blocks,
    # the (9C, HW) patch matrix, live tap/activation temporaries, weights.
    vmem_bytes = 4 * (2 * 2 * C * HW + 9 * C * HW + 12 * C * HW
                      + 2 * 9 * C * C + 8 * C)
    vmem_limit = int(min(max(2 * vmem_bytes, 32 * 1024 * 1024),
                         64 * 1024 * 1024))

    out_flat = pl.pallas_call(
        kernel,
        out_shape=jax.ShapeDtypeStruct((B, C, HW), x.dtype),
        grid_spec=pltpu.PrefetchScalarGridSpec(
            num_scalar_prefetch=0,
            grid=(B,),
            in_specs=[
                pl.BlockSpec((1, C, HW), lambda b: (b, 0, 0)),   # x (flat)
                pl.BlockSpec((1, C, 1), lambda b: (b, 0, 0)),    # gamma
                pl.BlockSpec((1, C, 1), lambda b: (b, 0, 0)),    # beta
                fixed((C, 9 * C)),                               # w1 (im2col)
                fixed((C, 1)),                                   # b1
                fixed((C, 9 * C)),                               # w2 (im2col)
                fixed((C, 1)),                                   # b2
                fixed((C, 1)),                                   # rho1
                fixed((C, 1)),                                   # rho2
            ],
            out_specs=pl.BlockSpec((1, C, HW), lambda b: (b, 0, 0)),
        ),
        compiler_params=pltpu.CompilerParams(
            dimension_semantics=("parallel",),
            vmem_limit_bytes=vmem_limit),
    )(x_flat, gamma_c, beta_c, w1_mat, b1_c, w2_mat, b2_c, rho1_c, rho2_c)
    return out_flat.reshape(B, C, H, W)


def _reference(x, gamma, beta, w1, b1, w2, b2, rho1, rho2, eps=1e-5):
    def conv(z, w, b):
        zp = jnp.pad(z, ((0, 0), (0, 0), (1, 1), (1, 1)), mode="reflect")
        out = jax.lax.conv_general_dilated(
            zp, w, (1, 1), "VALID",
            dimension_numbers=("NCHW", "OIHW", "NCHW"))
        return out + b.reshape(1, -1, 1, 1)

    def ada(y, rho):
        in_mean = jnp.mean(y, axis=(2, 3), keepdims=True)
        in_var = jnp.var(y, axis=(2, 3), keepdims=True, ddof=1)
        out_in = (y - in_mean) / jnp.sqrt(in_var + eps)
        ln_mean = jnp.mean(y, axis=(1, 2, 3), keepdims=True)
        ln_var = jnp.var(y, axis=(1, 2, 3), keepdims=True, ddof=1)
        out_ln = (y - ln_mean) / jnp.sqrt(ln_var + eps)
        out = (rho.reshape(1, -1, 1, 1) * out_in
               + (1 - rho.reshape(1, -1, 1, 1)) * out_ln)
        return out * gamma[:, :, None, None] + beta[:, :, None, None]

    h = conv(x, w1, b1)
    h = ada(h, rho1)
    h = jnp.maximum(h, 0.0)
    h = conv(h, w2, b2)
    h = ada(h, rho2)
    return h + x


if __name__ == "__main__":
    B, C, H, W = 2, 4, 16, 16          # dim = 4, use_bias = True
    key = jax.random.PRNGKey(0)
    kx, kg, kb, kw1, kb1, kw2, kb2 = jax.random.split(key, 7)

    x = jax.random.normal(kx, (B, C, H, W), jnp.float32)
    gamma = jax.random.normal(kg, (B, C), jnp.float32)
    beta = jax.random.normal(kb, (B, C), jnp.float32)

    w1 = 0.1 * jax.random.normal(kw1, (C, C, 3, 3), jnp.float32)
    b1 = 0.1 * jax.random.normal(kb1, (1, C), jnp.float32)
    w2 = 0.1 * jax.random.normal(kw2, (C, C, 3, 3), jnp.float32)
    b2 = 0.1 * jax.random.normal(kb2, (1, C), jnp.float32)
    rho1 = jnp.full((1, C), 0.9, jnp.float32)   # adaILN rho init (fill 0.9)
    rho2 = jnp.full((1, C), 0.9, jnp.float32)

    out = resnet_adailn_block(x, gamma, beta, w1, b1, w2, b2, rho1, rho2)
    out = jax.block_until_ready(out)

    ref = _reference(x, gamma, beta, w1, b1.reshape(C), w2, b2.reshape(C),
                     rho1.reshape(C), rho2.reshape(C))
    assert out.shape == (B, C, H, W)
    assert jnp.allclose(out, ref, rtol=1e-4, atol=1e-4), "mismatch vs reference"
    print("KERNEL_OK")
</pallas_src>

<mosaic_0001>
module attributes {stable_mosaic.version = 11 : i64} {
  func.func @_block_kernel(%arg0: i32, %arg1: memref<1x4x256xf32, #tpu.memory_space<vmem>>, %arg2: memref<1x4x1xf32, #tpu.memory_space<vmem>>, %arg3: memref<1x4x1xf32, #tpu.memory_space<vmem>>, %arg4: memref<4x36xf32, #tpu.memory_space<vmem>>, %arg5: memref<4x1xf32, #tpu.memory_space<vmem>>, %arg6: memref<4x36xf32, #tpu.memory_space<vmem>>, %arg7: memref<4x1xf32, #tpu.memory_space<vmem>>, %arg8: memref<4x1xf32, #tpu.memory_space<vmem>>, %arg9: memref<4x1xf32, #tpu.memory_space<vmem>>, %arg10: memref<1x4x256xf32, #tpu.memory_space<vmem>>) attributes {dimension_semantics = [#tpu.dimension_semantics<parallel>], iteration_bounds = array<i64: 2>, scalar_prefetch = 0 : i64, scratch_operands = 0 : i64, tpu.core_type = #tpu.core_type<tc>, window_params = [{transform_indices = @transform_0, window_bounds = array<i64: 1, 4, 256>}, {transform_indices = @transform_1, window_bounds = array<i64: 1, 4, 1>}, {transform_indices = @transform_2, window_bounds = array<i64: 1, 4, 1>}, {pipeline_mode = #tpu.pipeline_mode<synchronous>, transform_indices = @transform_3, window_bounds = array<i64: 4, 36>}, {pipeline_mode = #tpu.pipeline_mode<synchronous>, transform_indices = @transform_4, window_bounds = array<i64: 4, 1>}, {pipeline_mode = #tpu.pipeline_mode<synchronous>, transform_indices = @transform_5, window_bounds = array<i64: 4, 36>}, {pipeline_mode = #tpu.pipeline_mode<synchronous>, transform_indices = @transform_6, window_bounds = array<i64: 4, 1>}, {pipeline_mode = #tpu.pipeline_mode<synchronous>, transform_indices = @transform_7, window_bounds = array<i64: 4, 1>}, {pipeline_mode = #tpu.pipeline_mode<synchronous>, transform_indices = @transform_8, window_bounds = array<i64: 4, 1>}, {transform_indices = @transform_9, window_bounds = array<i64: 1, 4, 256>}]} {
    %c0 = arith.constant 0 : index
    %c0_0 = arith.constant 0 : index
    %c0_1 = arith.constant 0 : index
    %0 = vector.load %arg1[%c0, %c0_0, %c0_1] : memref<1x4x256xf32, #tpu.memory_space<vmem>>, vector<1x4x256xf32>
    %1 = vector.shape_cast %0 : vector<1x4x256xf32> to vector<4x256xf32>
    %c0_2 = arith.constant 0 : index
    %c0_3 = arith.constant 0 : index
    %c0_4 = arith.constant 0 : index
    %2 = vector.load %arg2[%c0_2, %c0_3, %c0_4] : memref<1x4x1xf32, #tpu.memory_space<vmem>>, vector<1x4x1xf32>
    %3 = vector.shape_cast %2 : vector<1x4x1xf32> to vector<4x1xf32>
    %c0_5 = arith.constant 0 : index
    %c0_6 = arith.constant 0 : index
    %c0_7 = arith.constant 0 : index
    %4 = vector.load %arg3[%c0_5, %c0_6, %c0_7] : memref<1x4x1xf32, #tpu.memory_space<vmem>>, vector<1x4x1xf32>
    %5 = vector.shape_cast %4 : vector<1x4x1xf32> to vector<4x1xf32>
    %c0_8 = arith.constant 0 : index
    %c0_9 = arith.constant 0 : index
    %6 = vector.load %arg8[%c0_8, %c0_9] : memref<4x1xf32, #tpu.memory_space<vmem>>, vector<4x1xf32>
    %c0_10 = arith.constant 0 : index
    %c0_11 = arith.constant 0 : index
    %7 = vector.load %arg9[%c0_10, %c0_11] : memref<4x1xf32, #tpu.memory_space<vmem>>, vector<4x1xf32>
    %c0_12 = arith.constant 0 : index
    %c0_13 = arith.constant 0 : index
    %8 = vector.load %arg5[%c0_12, %c0_13] : memref<4x1xf32, #tpu.memory_space<vmem>>, vector<4x1xf32>
    %c0_14 = arith.constant 0 : index
    %c0_15 = arith.constant 0 : index
    %9 = vector.load %arg7[%c0_14, %c0_15] : memref<4x1xf32, #tpu.memory_space<vmem>>, vector<4x1xf32>
    %10 = tpu.iota {dimensions = array<i32: 1>} : vector<1x256xi32>
    %c16_i32 = arith.constant 16 : i32
    %c0_i32 = arith.constant 0 : i32
    %11 = arith.cmpi eq, %c16_i32, %c0_i32 : i32
    %c1_i32 = arith.constant 1 : i32
    %12 = arith.select %11, %c1_i32, %c16_i32 : i32
    %13 = vector.broadcast %12 : i32 to vector<1x256xi32>
    %14 = arith.remsi %10, %13 : vector<1x256xi32>
    %c0_i32_16 = arith.constant 0 : i32
    %15 = vector.broadcast %c0_i32_16 : i32 to vector<1x256xi32>
    %16 = arith.cmpi ne, %14, %15 : vector<1x256xi32>
    %c0_i32_17 = arith.constant 0 : i32
    %17 = vector.broadcast %c0_i32_17 : i32 to vector<1x256xi32>
    %18 = arith.cmpi slt, %14, %17 : vector<1x256xi32>
    %c0_i32_18 = arith.constant 0 : i32
    %19 = arith.cmpi slt, %12, %c0_i32_18 : i32
    %20 = vector.broadcast %19 : i1 to vector<1x256xi1>
    %21 = vector.broadcast %20 : vector<1x256xi1> to vector<1x256xi1>
    %22 = arith.xori %18, %21 : vector<1x256xi1>
    %23 = arith.andi %22, %16 : vector<1x256xi1>
    %24 = vector.broadcast %12 : i32 to vector<1x256xi32>
    %25 = arith.addi %14, %24 : vector<1x256xi32>
    %26 = arith.select %23, %25, %14 : vector<1x256xi1>, vector<1x256xi32>
    %c0_i32_19 = arith.constant 0 : i32
    %27 = vector.broadcast %c0_i32_19 : i32 to vector<1x256xi32>
    %28 = arith.cmpi eq, %26, %27 : vector<1x256xi32>
    %c15_i32 = arith.constant 15 : i32
    %29 = vector.broadcast %c15_i32 : i32 to vector<1x256xi32>
    %30 = arith.cmpi eq, %26, %29 : vector<1x256xi32>
    %c16_i32_20 = arith.constant 16 : i32
    %31 = vector.broadcast %c16_i32_20 : i32 to vector<1x256xi32>
    %32 = arith.cmpi slt, %10, %31 : vector<1x256xi32>
    %c240_i32 = arith.constant 240 : i32
    %33 = vector.broadcast %c240_i32 : i32 to vector<1x256xi32>
    %34 = arith.cmpi sge, %10, %33 : vector<1x256xi32>
    %c240_i32_21 = arith.constant 240 : i32
    %35 = tpu.dynamic_rotate %1 by %c240_i32_21 dim 1 : vector<4x256xf32>, i32 -> vector<4x256xf32>
    %c16_i32_22 = arith.constant 16 : i32
    %36 = tpu.dynamic_rotate %1 by %c16_i32_22 dim 1 : vector<4x256xf32>, i32 -> vector<4x256xf32>
    %37 = vector.shape_cast %32 : vector<1x256xi1> to vector<1x256xi1>
    %38 = vector.broadcast %37 : vector<1x256xi1> to vector<4x256xi1>
    %39 = arith.select %38, %35, %36 : vector<4x256xi1>, vector<4x256xf32>
    %40 = vector.shape_cast %34 : vector<1x256xi1> to vector<1x256xi1>
    %41 = vector.broadcast %40 : vector<1x256xi1> to vector<4x256xi1>
    %42 = arith.select %41, %36, %35 : vector<4x256xi1>, vector<4x256xf32>
    %c255_i32 = arith.constant 255 : i32
    %43 = tpu.dynamic_rotate %39 by %c255_i32 dim 1 : vector<4x256xf32>, i32 -> vector<4x256xf32>
    %c1_i32_23 = arith.constant 1 : i32
    %44 = tpu.dynamic_rotate %39 by %c1_i32_23 dim 1 : vector<4x256xf32>, i32 -> vector<4x256xf32>
    %45 = vector.shape_cast %28 : vector<1x256xi1> to vector<1x256xi1>
    %46 = vector.broadcast %45 : vector<1x256xi1> to vector<4x256xi1>
    %47 = arith.select %46, %43, %44 : vector<4x256xi1>, vector<4x256xf32>
    %48 = vector.shape_cast %30 : vector<1x256xi1> to vector<1x256xi1>
    %49 = vector.broadcast %48 : vector<1x256xi1> to vector<4x256xi1>
    %50 = arith.select %49, %44, %43 : vector<4x256xi1>, vector<4x256xf32>
    %c255_i32_24 = arith.constant 255 : i32
    %51 = tpu.dynamic_rotate %1 by %c255_i32_24 dim 1 : vector<4x256xf32>, i32 -> vector<4x256xf32>
    %c1_i32_25 = arith.constant 1 : i32
    %52 = tpu.dynamic_rotate %1 by %c1_i32_25 dim 1 : vector<4x256xf32>, i32 -> vector<4x256xf32>
    %53 = vector.shape_cast %28 : vector<1x256xi1> to vector<1x256xi1>
    %54 = vector.broadcast %53 : vector<1x256xi1> to vector<4x256xi1>
    %55 = arith.select %54, %51, %52 : vector<4x256xi1>, vector<4x256xf32>
    %56 = vector.shape_cast %30 : vector<1x256xi1> to vector<1x256xi1>
    %57 = vector.broadcast %56 : vector<1x256xi1> to vector<4x256xi1>
    %58 = arith.select %57, %52, %51 : vector<4x256xi1>, vector<4x256xf32>
    %c255_i32_26 = arith.constant 255 : i32
    %59 = tpu.dynamic_rotate %42 by %c255_i32_26 dim 1 : vector<4x256xf32>, i32 -> vector<4x256xf32>
    %c1_i32_27 = arith.constant 1 : i32
    %60 = tpu.dynamic_rotate %42 by %c1_i32_27 dim 1 : vector<4x256xf32>, i32 -> vector<4x256xf32>
    %61 = vector.shape_cast %28 : vector<1x256xi1> to vector<1x256xi1>
    %62 = vector.broadcast %61 : vector<1x256xi1> to vector<4x256xi1>
    %63 = arith.select %62, %59, %60 : vector<4x256xi1>, vector<4x256xf32>
    %64 = vector.shape_cast %30 : vector<1x256xi1> to vector<1x256xi1>
    %65 = vector.broadcast %64 : vector<1x256xi1> to vector<4x256xi1>
    %66 = arith.select %65, %60, %59 : vector<4x256xi1>, vector<4x256xf32>
    %67 = tpu.concatenate %47, %39, %50, %55, %1, %58, %63, %42, %66 in 0 : vector<4x256xf32>, vector<4x256xf32>, vector<4x256xf32>, vector<4x256xf32>, vector<4x256xf32>, vector<4x256xf32>, vector<4x256xf32>, vector<4x256xf32>, vector<4x256xf32> -> vector<36x256xf32>
    %c0_28 = arith.constant 0 : index
    %c0_29 = arith.constant 0 : index
    %68 = vector.load %arg4[%c0_28, %c0_29] : memref<4x36xf32, #tpu.memory_space<vmem>>, vector<4x36xf32>
    %cst = arith.constant dense<0.000000e+00> : vector<4x256xf32>
    %69 = tpu.matmul %68, %67, %cst {dimension_numbers = #tpu.dot_dimension_numbers<[1], [0], [0], [1], [0, 0, 1, 1], [], []>} : vector<4x36xf32>, vector<36x256xf32>, vector<4x256xf32> -> vector<4x256xf32>
    %cst_30 = arith.constant dense<0.000000e+00> : vector<4xf32>
    %70 = vector.multi_reduction <add>, %69, %cst_30 [1] : vector<4x256xf32> to vector<4xf32>
    %71 = vector.shape_cast %70 : vector<4xf32> to vector<4x1xf32>
    %cst_31 = arith.constant 3.906250e-03 : f32
    %72 = vector.broadcast %cst_31 : f32 to vector<4x1xf32>
    %73 = arith.mulf %71, %72 : vector<4x1xf32>
    %74 = vector.broadcast %73 : vector<4x1xf32> to vector<4x256xf32>
    %75 = arith.subf %69, %74 : vector<4x256xf32>
    %76 = arith.mulf %75, %75 : vector<4x256xf32>
    %cst_32 = arith.constant dense<0.000000e+00> : vector<4xf32>
    %77 = vector.multi_reduction <add>, %76, %cst_32 [1] : vector<4x256xf32> to vector<4xf32>
    %78 = vector.shape_cast %77 : vector<4xf32> to vector<4x1xf32>
    %cst_33 = arith.constant 0.00392156886 : f32
    %79 = vector.broadcast %cst_33 : f32 to vector<4x1xf32>
    %80 = arith.mulf %78, %79 : vector<4x1xf32>
    %cst_34 = arith.constant 9.99999974E-6 : f32
    %81 = vector.broadcast %cst_34 : f32 to vector<4x1xf32>
    %82 = arith.addf %80, %81 : vector<4x1xf32>
    %83 = math.rsqrt %82 : vector<4x1xf32>
    %84 = arith.addf %73, %8 : vector<4x1xf32>
    %85 = vector.shape_cast %84 : vector<4x1xf32> to vector<1x4x1xf32>
    %cst_35 = arith.constant dense<0.000000e+00> : vector<1xf32>
    %86 = vector.multi_reduction <add>, %85, %cst_35 [1, 2] : vector<1x4x1xf32> to vector<1xf32>
    %87 = vector.shape_cast %86 : vector<1xf32> to vector<1x1x1xf32>
    %88 = vector.extract %87[0, 0, 0] : f32 from vector<1x1x1xf32>
    %cst_36 = arith.constant 2.500000e-01 : f32
    %89 = arith.mulf %88, %cst_36 : f32
    %90 = vector.broadcast %89 : f32 to vector<4x1xf32>
    %91 = arith.subf %84, %90 : vector<4x1xf32>
    %92 = vector.shape_cast %78 : vector<4x1xf32> to vector<1x4x1xf32>
    %cst_37 = arith.constant dense<0.000000e+00> : vector<1xf32>
    %93 = vector.multi_reduction <add>, %92, %cst_37 [1, 2] : vector<1x4x1xf32> to vector<1xf32>
    %94 = vector.shape_cast %93 : vector<1xf32> to vector<1x1x1xf32>
    %95 = vector.extract %94[0, 0, 0] : f32 from vector<1x1x1xf32>
    %96 = arith.mulf %91, %91 : vector<4x1xf32>
    %97 = vector.shape_cast %96 : vector<4x1xf32> to vector<1x4x1xf32>
    %cst_38 = arith.constant dense<0.000000e+00> : vector<1xf32>
    %98 = vector.multi_reduction <add>, %97, %cst_38 [1, 2] : vector<1x4x1xf32> to vector<1xf32>
    %99 = vector.shape_cast %98 : vector<1xf32> to vector<1x1x1xf32>
    %100 = vector.extract %99[0, 0, 0] : f32 from vector<1x1x1xf32>
    %cst_39 = arith.constant 2.560000e+02 : f32
    %101 = arith.mulf %cst_39, %100 : f32
    %102 = arith.addf %95, %101 : f32
    %cst_40 = arith.constant 9.77517105E-4 : f32
    %103 = arith.mulf %102, %cst_40 : f32
    %cst_41 = arith.constant 9.99999974E-6 : f32
    %104 = arith.addf %103, %cst_41 : f32
    %105 = math.rsqrt %104 : f32
    %106 = arith.mulf %6, %83 : vector<4x1xf32>
    %cst_42 = arith.constant 1.000000e+00 : f32
    %107 = vector.broadcast %cst_42 : f32 to vector<4x1xf32>
    %108 = arith.subf %107, %6 : vector<4x1xf32>
    %109 = vector.broadcast %105 : f32 to vector<4x1xf32>
    %110 = arith.mulf %108, %109 : vector<4x1xf32>
    %111 = arith.addf %106, %110 : vector<4x1xf32>
    %112 = arith.mulf %6, %83 : vector<4x1xf32>
    %113 = arith.mulf %112, %84 : vector<4x1xf32>
    %cst_43 = arith.constant 1.000000e+00 : f32
    %114 = vector.broadcast %cst_43 : f32 to vector<4x1xf32>
    %115 = arith.subf %114, %6 : vector<4x1xf32>
    %116 = vector.broadcast %105 : f32 to vector<4x1xf32>
    %117 = arith.mulf %115, %116 : vector<4x1xf32>
    %118 = vector.broadcast %89 : f32 to vector<4x1xf32>
    %119 = arith.mulf %117, %118 : vector<4x1xf32>
    %120 = arith.addf %113, %119 : vector<4x1xf32>
    %121 = arith.mulf %3, %111 : vector<4x1xf32>
    %122 = arith.mulf %3, %120 : vector<4x1xf32>
    %123 = arith.subf %5, %122 : vector<4x1xf32>
    %124 = arith.mulf %8, %121 : vector<4x1xf32>
    %125 = arith.addf %123, %124 : vector<4x1xf32>
    %126 = vector.broadcast %121 : vector<4x1xf32> to vector<4x256xf32>
    %127 = arith.mulf %69, %126 : vector<4x256xf32>
    %128 = vector.broadcast %125 : vector<4x1xf32> to vector<4x256xf32>
    %129 = arith.addf %127, %128 : vector<4x256xf32>
    %cst_44 = arith.constant 0.000000e+00 : f32
    %130 = vector.broadcast %cst_44 : f32 to vector<4x256xf32>
    %131 = arith.maximumf %129, %130 : vector<4x256xf32>
    %c240_i32_45 = arith.constant 240 : i32
    %132 = tpu.dynamic_rotate %131 by %c240_i32_45 dim 1 : vector<4x256xf32>, i32 -> vector<4x256xf32>
    %c16_i32_46 = arith.constant 16 : i32
    %133 = tpu.dynamic_rotate %131 by %c16_i32_46 dim 1 : vector<4x256xf32>, i32 -> vector<4x256xf32>
    %134 = vector.shape_cast %32 : vector<1x256xi1> to vector<1x256xi1>
    %135 = vector.broadcast %134 : vector<1x256xi1> to vector<4x256xi1>
    %136 = arith.select %135, %132, %133 : vector<4x256xi1>, vector<4x256xf32>
    %137 = vector.shape_cast %34 : vector<1x256xi1> to vector<1x256xi1>
    %138 = vector.broadcast %137 : vector<1x256xi1> to vector<4x256xi1>
    %139 = arith.select %138, %133, %132 : vector<4x256xi1>, vector<4x256xf32>
    %c255_i32_47 = arith.constant 255 : i32
    %140 = tpu.dynamic_rotate %136 by %c255_i32_47 dim 1 : vector<4x256xf32>, i32 -> vector<4x256xf32>
    %c1_i32_48 = arith.constant 1 : i32
    %141 = tpu.dynamic_rotate %136 by %c1_i32_48 dim 1 : vector<4x256xf32>, i32 -> vector<4x256xf32>
    %142 = vector.shape_cast %28 : vector<1x256xi1> to vector<1x256xi1>
    %143 = vector.broadcast %142 : vector<1x256xi1> to vector<4x256xi1>
    %144 = arith.select %143, %140, %141 : vector<4x256xi1>, vector<4x256xf32>
    %145 = vector.shape_cast %30 : vector<1x256xi1> to vector<1x256xi1>
    %146 = vector.broadcast %145 : vector<1x256xi1> to vector<4x256xi1>
    %147 = arith.select %146, %141, %140 : vector<4x256xi1>, vector<4x256xf32>
    %c255_i32_49 = arith.constant 255 : i32
    %148 = tpu.dynamic_rotate %131 by %c255_i32_49 dim 1 : vector<4x256xf32>, i32 -> vector<4x256xf32>
    %c1_i32_50 = arith.constant 1 : i32
    %149 = tpu.dynamic_rotate %131 by %c1_i32_50 dim 1 : vector<4x256xf32>, i32 -> vector<4x256xf32>
    %150 = vector.shape_cast %28 : vector<1x256xi1> to vector<1x256xi1>
    %151 = vector.broadcast %150 : vector<1x256xi1> to vector<4x256xi1>
    %152 = arith.select %151, %148, %149 : vector<4x256xi1>, vector<4x256xf32>
    %153 = vector.shape_cast %30 : vector<1x256xi1> to vector<1x256xi1>
    %154 = vector.broadcast %153 : vector<1x256xi1> to vector<4x256xi1>
    %155 = arith.select %154, %149, %148 : vector<4x256xi1>, vector<4x256xf32>
    %c255_i32_51 = arith.constant 255 : i32
    %156 = tpu.dynamic_rotate %139 by %c255_i32_51 dim 1 : vector<4x256xf32>, i32 -> vector<4x256xf32>
    %c1_i32_52 = arith.constant 1 : i32
    %157 = tpu.dynamic_rotate %139 by %c1_i32_52 dim 1 : vector<4x256xf32>, i32 -> vector<4x256xf32>
    %158 = vector.shape_cast %28 : vector<1x256xi1> to vector<1x256xi1>
    %159 = vector.broadcast %158 : vector<1x256xi1> to vector<4x256xi1>
    %160 = arith.select %159, %156, %157 : vector<4x256xi1>, vector<4x256xf32>
    %161 = vector.shape_cast %30 : vector<1x256xi1> to vector<1x256xi1>
    %162 = vector.broadcast %161 : vector<1x256xi1> to vector<4x256xi1>
    %163 = arith.select %162, %157, %156 : vector<4x256xi1>, vector<4x256xf32>
    %164 = tpu.concatenate %144, %136, %147, %152, %131, %155, %160, %139, %163 in 0 : vector<4x256xf32>, vector<4x256xf32>, vector<4x256xf32>, vector<4x256xf32>, vector<4x256xf32>, vector<4x256xf32>, vector<4x256xf32>, vector<4x256xf32>, vector<4x256xf32> -> vector<36x256xf32>
    %c0_53 = arith.constant 0 : index
    %c0_54 = arith.constant 0 : index
    %165 = vector.load %arg6[%c0_53, %c0_54] : memref<4x36xf32, #tpu.memory_space<vmem>>, vector<4x36xf32>
    %cst_55 = arith.constant dense<0.000000e+00> : vector<4x256xf32>
    %166 = tpu.matmul %165, %164, %cst_55 {dimension_numbers = #tpu.dot_dimension_numbers<[1], [0], [0], [1], [0, 0, 1, 1], [], []>} : vector<4x36xf32>, vector<36x256xf32>, vector<4x256xf32> -> vector<4x256xf32>
    %cst_56 = arith.constant dense<0.000000e+00> : vector<4xf32>
    %167 = vector.multi_reduction <add>, %166, %cst_56 [1] : vector<4x256xf32> to vector<4xf32>
    %168 = vector.shape_cast %167 : vector<4xf32> to vector<4x1xf32>
    %cst_57 = arith.constant 3.906250e-03 : f32
    %169 = vector.broadcast %cst_57 : f32 to vector<4x1xf32>
    %170 = arith.mulf %168, %169 : vector<4x1xf32>
    %171 = vector.broadcast %170 : vector<4x1xf32> to vector<4x256xf32>
    %172 = arith.subf %166, %171 : vector<4x256xf32>
    %173 = arith.mulf %172, %172 : vector<4x256xf32>
    %cst_58 = arith.constant dense<0.000000e+00> : vector<4xf32>
    %174 = vector.multi_reduction <add>, %173, %cst_58 [1] : vector<4x256xf32> to vector<4xf32>
    %175 = vector.shape_cast %174 : vector<4xf32> to vector<4x1xf32>
    %cst_59 = arith.constant 0.00392156886 : f32
    %176 = vector.broadcast %cst_59 : f32 to vector<4x1xf32>
    %177 = arith.mulf %175, %176 : vector<4x1xf32>
    %cst_60 = arith.constant 9.99999974E-6 : f32
    %178 = vector.broadcast %cst_60 : f32 to vector<4x1xf32>
    %179 = arith.addf %177, %178 : vector<4x1xf32>
    %180 = math.rsqrt %179 : vector<4x1xf32>
    %181 = arith.addf %170, %9 : vector<4x1xf32>
    %182 = vector.shape_cast %181 : vector<4x1xf32> to vector<1x4x1xf32>
    %cst_61 = arith.constant dense<0.000000e+00> : vector<1xf32>
    %183 = vector.multi_reduction <add>, %182, %cst_61 [1, 2] : vector<1x4x1xf32> to vector<1xf32>
    %184 = vector.shape_cast %183 : vector<1xf32> to vector<1x1x1xf32>
    %185 = vector.extract %184[0, 0, 0] : f32 from vector<1x1x1xf32>
    %cst_62 = arith.constant 2.500000e-01 : f32
    %186 = arith.mulf %185, %cst_62 : f32
    %187 = vector.broadcast %186 : f32 to vector<4x1xf32>
    %188 = arith.subf %181, %187 : vector<4x1xf32>
    %189 = vector.shape_cast %175 : vector<4x1xf32> to vector<1x4x1xf32>
    %cst_63 = arith.constant dense<0.000000e+00> : vector<1xf32>
    %190 = vector.multi_reduction <add>, %189, %cst_63 [1, 2] : vector<1x4x1xf32> to vector<1xf32>
    %191 = vector.shape_cast %190 : vector<1xf32> to vector<1x1x1xf32>
    %192 = vector.extract %191[0, 0, 0] : f32 from vector<1x1x1xf32>
    %193 = arith.mulf %188, %188 : vector<4x1xf32>
    %194 = vector.shape_cast %193 : vector<4x1xf32> to vector<1x4x1xf32>
    %cst_64 = arith.constant dense<0.000000e+00> : vector<1xf32>
    %195 = vector.multi_reduction <add>, %194, %cst_64 [1, 2] : vector<1x4x1xf32> to vector<1xf32>
    %196 = vector.shape_cast %195 : vector<1xf32> to vector<1x1x1xf32>
    %197 = vector.extract %196[0, 0, 0] : f32 from vector<1x1x1xf32>
    %cst_65 = arith.constant 2.560000e+02 : f32
    %198 = arith.mulf %cst_65, %197 : f32
    %199 = arith.addf %192, %198 : f32
    %cst_66 = arith.constant 9.77517105E-4 : f32
    %200 = arith.mulf %199, %cst_66 : f32
    %cst_67 = arith.constant 9.99999974E-6 : f32
    %201 = arith.addf %200, %cst_67 : f32
    %202 = math.rsqrt %201 : f32
    %203 = arith.mulf %7, %180 : vector<4x1xf32>
    %cst_68 = arith.constant 1.000000e+00 : f32
    %204 = vector.broadcast %cst_68 : f32 to vector<4x1xf32>
    %205 = arith.subf %204, %7 : vector<4x1xf32>
    %206 = vector.broadcast %202 : f32 to vector<4x1xf32>
    %207 = arith.mulf %205, %206 : vector<4x1xf32>
    %208 = arith.addf %203, %207 : vector<4x1xf32>
    %209 = arith.mulf %7, %180 : vector<4x1xf32>
    %210 = arith.mulf %209, %181 : vector<4x1xf32>
    %cst_69 = arith.constant 1.000000e+00 : f32
    %211 = vector.broadcast %cst_69 : f32 to vector<4x1xf32>
    %212 = arith.subf %211, %7 : vector<4x1xf32>
    %213 = vector.broadcast %202 : f32 to vector<4x1xf32>
    %214 = arith.mulf %212, %213 : vector<4x1xf32>
    %215 = vector.broadcast %186 : f32 to vector<4x1xf32>
    %216 = arith.mulf %214, %215 : vector<4x1xf32>
    %217 = arith.addf %210, %216 : vector<4x1xf32>
    %218 = arith.mulf %3, %208 : vector<4x1xf32>
    %219 = arith.mulf %3, %217 : vector<4x1xf32>
    %220 = arith.subf %5, %219 : vector<4x1xf32>
    %221 = arith.mulf %9, %218 : vector<4x1xf32>
    %222 = arith.addf %220, %221 : vector<4x1xf32>
    %223 = vector.broadcast %218 : vector<4x1xf32> to vector<4x256xf32>
    %224 = arith.mulf %166, %223 : vector<4x256xf32>
    %225 = vector.broadcast %222 : vector<4x1xf32> to vector<4x256xf32>
    %226 = arith.addf %224, %225 : vector<4x256xf32>
    %227 = arith.addf %226, %1 : vector<4x256xf32>
    %c0_70 = arith.constant 0 : index
    %c0_71 = arith.constant 0 : index
    %c0_72 = arith.constant 0 : index
    %228 = vector.load %arg10[%c0_70, %c0_71, %c0_72] : memref<1x4x256xf32, #tpu.memory_space<vmem>>, vector<1x4x256xf32>
    %229 = vector.shape_cast %228 : vector<1x4x256xf32> to vector<4x256xf32>
    %230 = vector.shape_cast %227 : vector<4x256xf32> to vector<1x4x256xf32>
    tpu.vector_store %arg10[%c0_70, %c0_71, %c0_72], %230 {strides = array<i32>} : memref<1x4x256xf32, #tpu.memory_space<vmem>>, vector<1x4x256xf32>,
    return
  }
  func.func @transform_0(%arg0: i32) -> (i32, i32, i32) {
    %c0_i32 = arith.constant 0 : i32
    %c0_i32_0 = arith.constant 0 : i32
    %c0_i32_1 = arith.constant 0 : i32
    return %arg0, %c0_i32, %c0_i32_0 : i32, i32, i32
  }
  func.func @transform_1(%arg0: i32) -> (i32, i32, i32) {
    %c0_i32 = arith.constant 0 : i32
    %c0_i32_0 = arith.constant 0 : i32
    %c0_i32_1 = arith.constant 0 : i32
    return %arg0, %c0_i32, %c0_i32_0 : i32, i32, i32
  }
  func.func @transform_2(%arg0: i32) -> (i32, i32, i32) {
    %c0_i32 = arith.constant 0 : i32
    %c0_i32_0 = arith.constant 0 : i32
    %c0_i32_1 = arith.constant 0 : i32
    return %arg0, %c0_i32, %c0_i32_0 : i32, i32, i32
  }
  func.func @transform_3(%arg0: i32) -> (i32, i32) {
    %c0_i32 = arith.constant 0 : i32
    %c0_i32_0 = arith.constant 0 : i32
    %c0_i32_1 = arith.constant 0 : i32
    return %c0_i32, %c0_i32_0 : i32, i32
  }
  func.func @transform_4(%arg0: i32) -> (i32, i32) {
    %c0_i32 = arith.constant 0 : i32
    %c0_i32_0 = arith.constant 0 : i32
    %c0_i32_1 = arith.constant 0 : i32
    return %c0_i32, %c0_i32_0 : i32, i32
  }
  func.func @transform_5(%arg0: i32) -> (i32, i32) {
    %c0_i32 = arith.constant 0 : i32
    %c0_i32_0 = arith.constant 0 : i32
    %c0_i32_1 = arith.constant 0 : i32
    return %c0_i32, %c0_i32_0 : i32, i32
  }
  func.func @transform_6(%arg0: i32) -> (i32, i32) {
    %c0_i32 = arith.constant 0 : i32
    %c0_i32_0 = arith.constant 0 : i32
    %c0_i32_1 = arith.constant 0 : i32
    return %c0_i32, %c0_i32_0 : i32, i32
  }
  func.func @transform_7(%arg0: i32) -> (i32, i32) {
    %c0_i32 = arith.constant 0 : i32
    %c0_i32_0 = arith.constant 0 : i32
    %c0_i32_1 = arith.constant 0 : i32
    return %c0_i32, %c0_i32_0 : i32, i32
  }
  func.func @transform_8(%arg0: i32) -> (i32, i32) {
    %c0_i32 = arith.constant 0 : i32
    %c0_i32_0 = arith.constant 0 : i32
    %c0_i32_1 = arith.constant 0 : i32
    return %c0_i32, %c0_i32_0 : i32, i32
  }
  func.func @transform_9(%arg0: i32) -> (i32, i32, i32) {
    %c0_i32 = arith.constant 0 : i32
    %c0_i32_0 = arith.constant 0 : i32
    %c0_i32_1 = arith.constant 0 : i32
    return %arg0, %c0_i32, %c0_i32_0 : i32, i32, i32
  }
}

</mosaic_0001>

<llo_original>
// kernel: tpu_custom_call.1
$region0: #{tpu_custom_call.1}
  #allocation0 [shape = 'u32[]', space=smem, size = 0x4, offset = 0x4, fixed_abs, tag = 'smem constant byte address 0x4 - core index']
  #allocation1 [shape = 'u32[144,128]{1,0:T(1,128)}', space=vmem, size = 0x12000, scoped, tag = 'internal scratch']
  %s0 = inlined_call_operand.vmem [shape: f32[2,4,256], index: 0, kind: input, shape index: {}]
  %s1 = inlined_call_operand.vmem [shape: f32[2,4,1], index: 1, kind: input, shape index: {}]
  %s2 = inlined_call_operand.vmem [shape: f32[2,4,1], index: 2, kind: input, shape index: {}]
  %s3 = inlined_call_operand.vmem [shape: f32[4,36], index: 3, kind: input, shape index: {}]
  %s4 = inlined_call_operand.vmem [shape: f32[4,1], index: 4, kind: input, shape index: {}]
  %s5 = inlined_call_operand.vmem [shape: f32[4,36], index: 5, kind: input, shape index: {}]
  %s6 = inlined_call_operand.vmem [shape: f32[4,1], index: 6, kind: input, shape index: {}]
  %s7 = inlined_call_operand.vmem [shape: f32[4,1], index: 7, kind: input, shape index: {}]
  %s8 = inlined_call_operand.vmem [shape: f32[4,1], index: 8, kind: input, shape index: {}]
  %s9 = inlined_call_operand.hbm [shape: f32[2,4,256], index: 9, kind: output, shape index: {}]
  %s10 = sld [smem:[#allocation0]]
  $region69: #{tpu_custom_call.1} parent=0
    _
  %s12 = ssub.s32 1, %s10
  %s13 = scalar_select 0, %s12, %s10
  $region1: #{tpu_custom_call.1} parent=0
    #allocation2 [shape = 'u8[8192]{0}', space=vmem, size = 0x2000, scoped, tag = 'output window, operand 0']
    #allocation3 [shape = 's32[2]{0}', space=sflag, size = 0x8, scoped, tag = 'scoped memory for tpu_custom_call.1']
    %14 = vsyncpa [#allocation3], 0
    %s15 = scalar_lea.sflag [#allocation3], 1
    %16 = vsyncpa %s15, 0
    loop: start=0, step=1, limit=4
    $region2: #{tpu_custom_call.1} parent=1 // loop_pre_header
      _
    $region3: #{tpu_custom_call.1} parent=1 // loop_header
      %s18 = sphi 0, %s22
      %p19 = scmp.ge.s32.totalorder %s18, 4
      %s28 = sphi 0, %s30
      %s31 = sphi 0, %s28
      %s32 = sphi 0, %s31
      %s48 = sphi 0, %s32
      %s54 = sphi 0, %s56
      %s57 = sphi 0, %s54
      %s58 = sphi 0, %s57
      %s74 = sphi 0, %s58
      %s80 = sphi 0, %s82
      %s83 = sphi 0, %s80
      %s84 = sphi 0, %s83
      %s100 = sphi 0, %s84
      %s104 = sphi 0, %s104
      %s106 = sphi 0, %s104
      %s107 = sphi 0, %s106
      %s121 = sphi 0, %s107
      %s125 = sphi 0, %s125
      %s127 = sphi 0, %s125
      %s128 = sphi 0, %s127
      %s142 = sphi 0, %s128
      %s146 = sphi 0, %s146
      %s148 = sphi 0, %s146
      %s149 = sphi 0, %s148
      %s163 = sphi 0, %s149
      %s167 = sphi 0, %s167
      %s169 = sphi 0, %s167
      %s170 = sphi 0, %s169
      %s184 = sphi 0, %s170
      %s188 = sphi 0, %s188
      %s190 = sphi 0, %s188
      %s191 = sphi 0, %s190
      %s205 = sphi 0, %s191
      %s209 = sphi 0, %s209
      %s211 = sphi 0, %s209
      %s212 = sphi 0, %s211
      %s226 = sphi 0, %s212
      %s232 = sphi 0, %s234
      %s235 = sphi 0, %s232
      %s236 = sphi 0, %s235
      %s252 = sphi 0, %s236
    $region4: #{tpu_custom_call.1} parent=1 // loop_header_branch
      %21 = sbr.rel (%p19) target = $region8
    $region5: #{tpu_custom_call.1} parent=1 // loop_body
      %s23 = ssub.s32 %s18, 1
      %s24 = ssub.s32 %s18, 2
      %s25 = sadd.s32 %s18, 1
      %s26 = ssub.s32 %s18, %s25
      %p27 = scmp.eq.s32.totalorder %s26, 0
      %s29 = sadd.s32 %s28, 1
      %s30 = scalar_select %p27, %s28, %s29
      %p33 = pneg %p27
      %p34 = scmp.eq.s32.totalorder %s18, 1
      %p35 = por %p33, %p34
      %p36 = scmp.ne.s32.totalorder %s28, %s31
      %p37 = scmp.eq.s32.totalorder %s18, 0
      %p38 = por %p36, %p37
      %p39 = scmp.ne.s32.totalorder %s28, %s31
      %p40 = scmp.eq.s32.totalorder %s23, 1
      %p41 = por %p39, %p40
      %p42 = scmp.ne.s32.totalorder %s31, %s32
      %p43 = scmp.eq.s32.totalorder %s23, 0
      %p44 = por %p42, %p43
      %p45 = scmp.ne.s32.totalorder %s31, %s32
      %p46 = scmp.eq.s32.totalorder %s24, 1
      %p47 = por %p45, %p46
      %p49 = scmp.ne.s32.totalorder %s32, %s48
      %p50 = scmp.eq.s32.totalorder %s24, 0
      %p51 = por %p49, %p50
      %s52 = ssub.s32 %s18, %s25
      %p53 = scmp.eq.s32.totalorder %s52, 0
      %s55 = sadd.s32 %s54, 1
      %s56 = scalar_select %p53, %s54, %s55
      %p59 = pneg %p53
      %p60 = scmp.eq.s32.totalorder %s18, 1
      %p61 = por %p59, %p60
      %p62 = scmp.ne.s32.totalorder %s54, %s57
      %p63 = scmp.eq.s32.totalorder %s18, 0
      %p64 = por %p62, %p63
      %p65 = scmp.ne.s32.totalorder %s54, %s57
      %p66 = scmp.eq.s32.totalorder %s23, 1
      %p67 = por %p65, %p66
      %p68 = scmp.ne.s32.totalorder %s57, %s58
      %p69 = scmp.eq.s32.totalorder %s23, 0
      %p70 = por %p68, %p69
      %p71 = scmp.ne.s32.totalorder %s57, %s58
      %p72 = scmp.eq.s32.totalorder %s24, 1
      %p73 = por %p71, %p72
      %p75 = scmp.ne.s32.totalorder %s58, %s74
      %p76 = scmp.eq.s32.totalorder %s24, 0
      %p77 = por %p75, %p76
      %s78 = ssub.s32 %s18, %s25
      %p79 = scmp.eq.s32.totalorder %s78, 0
      %s81 = sadd.s32 %s80, 1
      %s82 = scalar_select %p79, %s80, %s81
      %p85 = pneg %p79
      %p86 = scmp.eq.s32.totalorder %s18, 1
      %p87 = por %p85, %p86
      %p88 = scmp.ne.s32.totalorder %s80, %s83
      %p89 = scmp.eq.s32.totalorder %s18, 0
      %p90 = por %p88, %p89
      %p91 = scmp.ne.s32.totalorder %s80, %s83
      %p92 = scmp.eq.s32.totalorder %s23, 1
      %p93 = por %p91, %p92
      %p94 = scmp.ne.s32.totalorder %s83, %s84
      %p95 = scmp.eq.s32.totalorder %s23, 0
      %p96 = por %p94, %p95
      %p97 = scmp.ne.s32.totalorder %s83, %s84
      %p98 = scmp.eq.s32.totalorder %s24, 1
      %p99 = por %p97, %p98
      %p101 = scmp.ne.s32.totalorder %s84, %s100
      %p102 = scmp.eq.s32.totalorder %s24, 0
      %p103 = por %p101, %p102
      %s105 = sadd.s32 %s104, 1
      %p108 = scmp.eq.s32.totalorder %s18, 1
      %p109 = scmp.ne.s32.totalorder %s104, %s106
      %p110 = scmp.eq.s32.totalorder %s18, 0
      %p111 = por %p109, %p110
      %p112 = scmp.ne.s32.totalorder %s104, %s106
      %p113 = scmp.eq.s32.totalorder %s23, 1
      %p114 = por %p112, %p113
      %p115 = scmp.ne.s32.totalorder %s106, %s107
      %p116 = scmp.eq.s32.totalorder %s23, 0
      %p117 = por %p115, %p116
      %p118 = scmp.ne.s32.totalorder %s106, %s107
      %p119 = scmp.eq.s32.totalorder %s24, 1
      %p120 = por %p118, %p119
      %p122 = scmp.ne.s32.totalorder %s107, %s121
      %p123 = scmp.eq.s32.totalorder %s24, 0
      %p124 = por %p122, %p123
      %s126 = sadd.s32 %s125, 1
      %p129 = scmp.eq.s32.totalorder %s18, 1
      %p130 = scmp.ne.s32.totalorder %s125, %s127
      %p131 = scmp.eq.s32.totalorder %s18, 0
      %p132 = por %p130, %p131
      %p133 = scmp.ne.s32.totalorder %s125, %s127
      %p134 = scmp.eq.s32.totalorder %s23, 1
      %p135 = por %p133, %p134
      %p136 = scmp.ne.s32.totalorder %s127, %s128
      %p137 = scmp.eq.s32.totalorder %s23, 0
      %p138 = por %p136, %p137
      %p139 = scmp.ne.s32.totalorder %s127, %s128
      %p140 = scmp.eq.s32.totalorder %s24, 1
      %p141 = por %p139, %p140
      %p143 = scmp.ne.s32.totalorder %s128, %s142
      %p144 = scmp.eq.s32.totalorder %s24, 0
      %p145 = por %p143, %p144
      %s147 = sadd.s32 %s146, 1
      %p150 = scmp.eq.s32.totalorder %s18, 1
      %p151 = scmp.ne.s32.totalorder %s146, %s148
      %p152 = scmp.eq.s32.totalorder %s18, 0
      %p153 = por %p151, %p152
      %p154 = scmp.ne.s32.totalorder %s146, %s148
      %p155 = scmp.eq.s32.totalorder %s23, 1
      %p156 = por %p154, %p155
      %p157 = scmp.ne.s32.totalorder %s148, %s149
      %p158 = scmp.eq.s32.totalorder %s23, 0
      %p159 = por %p157, %p158
      %p160 = scmp.ne.s32.totalorder %s148, %s149
      %p161 = scmp.eq.s32.totalorder %s24, 1
      %p162 = por %p160, %p161
      %p164 = scmp.ne.s32.totalorder %s149, %s163
      %p165 = scmp.eq.s32.totalorder %s24, 0
      %p166 = por %p164, %p165
      %s168 = sadd.s32 %s167, 1
      %p171 = scmp.eq.s32.totalorder %s18, 1
      %p172 = scmp.ne.s32.totalorder %s167, %s169
      %p173 = scmp.eq.s32.totalorder %s18, 0
      %p174 = por %p172, %p173
      %p175 = scmp.ne.s32.totalorder %s167, %s169
      %p176 = scmp.eq.s32.totalorder %s23, 1
      %p177 = por %p175, %p176
      %p178 = scmp.ne.s32.totalorder %s169, %s170
      %p179 = scmp.eq.s32.totalorder %s23, 0
      %p180 = por %p178, %p179
      %p181 = scmp.ne.s32.totalorder %s169, %s170
      %p182 = scmp.eq.s32.totalorder %s24, 1
      %p183 = por %p181, %p182
      %p185 = scmp.ne.s32.totalorder %s170, %s184
      %p186 = scmp.eq.s32.totalorder %s24, 0
      %p187 = por %p185, %p186
      %s189 = sadd.s32 %s188, 1
      %p192 = scmp.eq.s32.totalorder %s18, 1
      %p193 = scmp.ne.s32.totalorder %s188, %s190
      %p194 = scmp.eq.s32.totalorder %s18, 0
      %p195 = por %p193, %p194
      %p196 = scmp.ne.s32.totalorder %s188, %s190
      %p197 = scmp.eq.s32.totalorder %s23, 1
      %p198 = por %p196, %p197
      %p199 = scmp.ne.s32.totalorder %s190, %s191
      %p200 = scmp.eq.s32.totalorder %s23, 0
      %p201 = por %p199, %p200
      %p202 = scmp.ne.s32.totalorder %s190, %s191
      %p203 = scmp.eq.s32.totalorder %s24, 1
      %p204 = por %p202, %p203
      %p206 = scmp.ne.s32.totalorder %s191, %s205
      %p207 = scmp.eq.s32.totalorder %s24, 0
      %p208 = por %p206, %p207
      %s210 = sadd.s32 %s209, 1
      %p213 = scmp.eq.s32.totalorder %s18, 1
      %p214 = scmp.ne.s32.totalorder %s209, %s211
      %p215 = scmp.eq.s32.totalorder %s18, 0
      %p216 = por %p214, %p215
      %p217 = scmp.ne.s32.totalorder %s209, %s211
      %p218 = scmp.eq.s32.totalorder %s23, 1
      %p219 = por %p217, %p218
      %p220 = scmp.ne.s32.totalorder %s211, %s212
      %p221 = scmp.eq.s32.totalorder %s23, 0
      %p222 = por %p220, %p221
      %p223 = scmp.ne.s32.totalorder %s211, %s212
      %p224 = scmp.eq.s32.totalorder %s24, 1
      %p225 = por %p223, %p224
      %p227 = scmp.ne.s32.totalorder %s212, %s226
      %p228 = scmp.eq.s32.totalorder %s24, 0
      %p229 = por %p227, %p228
      %s230 = ssub.s32 %s18, %s25
      %p231 = scmp.eq.s32.totalorder %s230, 0
      %s233 = sadd.s32 %s232, 1
      %s234 = scalar_select %p231, %s232, %s233
      %p237 = pneg %p231
      %p238 = scmp.eq.s32.totalorder %s18, 1
      %p239 = por %p237, %p238
      %p240 = scmp.ne.s32.totalorder %s232, %s235
      %p241 = scmp.eq.s32.totalorder %s18, 0
      %p242 = por %p240, %p241
      %p243 = scmp.ne.s32.totalorder %s232, %s235
      %p244 = scmp.eq.s32.totalorder %s23, 1
      %p245 = por %p243, %p244
      %p246 = scmp.ne.s32.totalorder %s235, %s236
      %p247 = scmp.eq.s32.totalorder %s23, 0
      %p248 = por %p246, %p247
      %p249 = scmp.ne.s32.totalorder %s235, %s236
      %p250 = scmp.eq.s32.totalorder %s24, 1
      %p251 = por %p249, %p250
      %p253 = scmp.ne.s32.totalorder %s236, %s252
      %p254 = scmp.eq.s32.totalorder %s24, 0
      %p255 = por %p253, %p254
      %p256 = scmp.le.s32.totalorder 1, %s18
      %p257 = scmp.lt.s32.totalorder %s18, 3
      %p258 = pnand %p256, %p257
      %p259 = pneg %p258
      // Predicated region
      $region9: #{tpu_custom_call.1} parent=5 // pred_check
        _
      $region10: #{tpu_custom_call.1} parent=5 // pred_check_branch
        %261 = sbr.rel (%p258) target = $region12
      $region11: #{tpu_custom_call.1} parent=5 // pred_region
        %s262 = ssub.s32 %s18, 1
        // Predicated region
        $region13: #{tpu_custom_call.1} parent=11 // pred_check
          %p263 = pneg %p117
        $region14: #{tpu_custom_call.1} parent=11 // pred_check_branch
          %265 = sbr.rel (%p263) target = $region16
        $region15: #{tpu_custom_call.1} parent=11 // pred_region
          _
        $region16: #{tpu_custom_call.1} parent=11 // pred_fallthru
          _
        // Predicated region
        $region17: #{tpu_custom_call.1} parent=11 // pred_check
          %p266 = pneg %p138
        $region18: #{tpu_custom_call.1} parent=11 // pred_check_branch
          %268 = sbr.rel (%p266) target = $region20
        $region19: #{tpu_custom_call.1} parent=11 // pred_region
          _
        $region20: #{tpu_custom_call.1} parent=11 // pred_fallthru
          _
        // Predicated region
        $region21: #{tpu_custom_call.1} parent=11 // pred_check
          %p269 = pneg %p159
        $region22: #{tpu_custom_call.1} parent=11 // pred_check_branch
          %271 = sbr.rel (%p269) target = $region24
        $region23: #{tpu_custom_call.1} parent=11 // pred_region
          _
        $region24: #{tpu_custom_call.1} parent=11 // pred_fallthru
          _
        // Predicated region
        $region25: #{tpu_custom_call.1} parent=11 // pred_check
          %p272 = pneg %p180
        $region26: #{tpu_custom_call.1} parent=11 // pred_check_branch
          %274 = sbr.rel (%p272) target = $region28
        $region27: #{tpu_custom_call.1} parent=11 // pred_region
          _
        $region28: #{tpu_custom_call.1} parent=11 // pred_fallthru
          _
        // Predicated region
        $region29: #{tpu_custom_call.1} parent=11 // pred_check
          %p275 = pneg %p201
        $region30: #{tpu_custom_call.1} parent=11 // pred_check_branch
          %277 = sbr.rel (%p275) target = $region32
        $region31: #{tpu_custom_call.1} parent=11 // pred_region
          _
        $region32: #{tpu_custom_call.1} parent=11 // pred_fallthru
          _
        // Predicated region
        $region33: #{tpu_custom_call.1} parent=11 // pred_check
          %p278 = pneg %p222
        $region34: #{tpu_custom_call.1} parent=11 // pred_check_branch
          %280 = sbr.rel (%p278) target = $region36
        $region35: #{tpu_custom_call.1} parent=11 // pred_region
          _
        $region36: #{tpu_custom_call.1} parent=11 // pred_fallthru
          _
      $region12: #{tpu_custom_call.1} parent=5 // pred_fallthru
        _
      %p281 = scmp.lt.s32.totalorder %s18, 2
      // Predicated region
      $region37: #{tpu_custom_call.1} parent=5 // pred_check
        %p282 = pneg %p281
      $region38: #{tpu_custom_call.1} parent=5 // pred_check_branch
        %284 = sbr.rel (%p282) target = $region40
      $region39: #{tpu_custom_call.1} parent=5 // pred_region
        // Predicated region
        $region41: #{tpu_custom_call.1} parent=39 // pred_check
          %p285 = pneg %p38
        $region42: #{tpu_custom_call.1} parent=39 // pred_check_branch
          %287 = sbr.rel (%p285) target = $region44
        $region43: #{tpu_custom_call.1} parent=39 // pred_region
          %p288 = scmp.lt.s32.totalorder %s18, 1
          %s289 = scalar_select %p288, %s18, 1
          %s290 = smul.addr %s289, 2
          %s291 = smul.addr %s290, 4
          %s292 = scalar_lea.vmem %s0, %s291
        $region44: #{tpu_custom_call.1} parent=39 // pred_fallthru
          _
        // Predicated region
        $region45: #{tpu_custom_call.1} parent=39 // pred_check
          %p293 = pneg %p64
        $region46: #{tpu_custom_call.1} parent=39 // pred_check_branch
          %295 = sbr.rel (%p293) target = $region48
        $region47: #{tpu_custom_call.1} parent=39 // pred_region
          %p296 = scmp.lt.s32.totalorder %s18, 1
          %s297 = scalar_select %p296, %s18, 1
          %s298 = smul.addr %s297, 4
          %s299 = scalar_lea.vmem %s1, %s298
        $region48: #{tpu_custom_call.1} parent=39 // pred_fallthru
          _
        // Predicated region
        $region49: #{tpu_custom_call.1} parent=39 // pred_check
          %p300 = pneg %p90
        $region50: #{tpu_custom_call.1} parent=39 // pred_check_branch
          %302 = sbr.rel (%p300) target = $region52
        $region51: #{tpu_custom_call.1} parent=39 // pred_region
          %p303 = scmp.lt.s32.totalorder %s18, 1
          %s304 = scalar_select %p303, %s18, 1
          %s305 = smul.addr %s304, 4
          %s306 = scalar_lea.vmem %s2, %s305
        $region52: #{tpu_custom_call.1} parent=39 // pred_fallthru
          _
      $region40: #{tpu_custom_call.1} parent=5 // pred_fallthru
        _
      %p307 = scmp.le.s32.totalorder 1, %s18
      %p308 = scmp.lt.s32.totalorder %s18, 3
      %p309 = pnand %p307, %p308
      %p310 = pneg %p309
      // Predicated region
      $region53: #{tpu_custom_call.1} parent=5 // pred_check
        _
      $region54: #{tpu_custom_call.1} parent=5 // pred_check_branch
        %312 = sbr.rel (%p309) target = $region56
      $region55: #{tpu_custom_call.1} parent=5 // pred_region
        %s313 = ssub.s32 %s18, 1
        %p314 = scmp.lt.s32.totalorder %s23, 1
        %s315 = scalar_select %p314, %s23, 1
        %s316 = smul.addr %s315, 2
        %s317 = smul.addr %s316, 4
        %s318 = scalar_lea.vmem %s0, %s317
        %p319 = pneg %p44
        %p320 = pneg %p41
        %p321 = scmp.lt.s32.totalorder %s23, 1
        %s322 = scalar_select %p321, %s23, 1
        %s323 = smul.addr %s322, 4
        %s324 = scalar_lea.vmem %s1, %s323
        %p325 = pneg %p70
        %p326 = pneg %p67
        %p327 = scmp.lt.s32.totalorder %s23, 1
        %s328 = scalar_select %p327, %s23, 1
        %s329 = smul.addr %s328, 4
        %s330 = scalar_lea.vmem %s2, %s329
        %p331 = pneg %p96
        %p332 = pneg %p93
        %p333 = pneg %p117
        %p334 = pneg %p114
        %p335 = pneg %p138
        %p336 = pneg %p135
        %p337 = pneg %p159
        %p338 = pneg %p156
        %p339 = pneg %p180
        %p340 = pneg %p177
        %p341 = pneg %p201
        %p342 = pneg %p198
        %p343 = pneg %p222
        %p344 = pneg %p219
        %p345 = pneg %p248
        %p346 = pneg %p245
        %s347 = sand.u32 %s235, 1
        %s348 = scalar_lea.sflag [#allocation3], %s347
        %s349 = sand.u32 %s235, 1
        %s350 = smul.addr %s349, 8
        %s351 = scalar_lea.vmem [#allocation2], %s350
        %p352 = scmp.lt.s32.totalorder %s23, 1
        %s353 = scalar_select %p352, %s23, 1
        %s354 = smul.addr %s353, 2
        %s355 = smul.addr %s354, 4
        %s356 = scalar_lea.vmem %s0, %s355
        %p357 = scmp.lt.s32.totalorder %s23, 1
        %s358 = scalar_select %p357, %s23, 1
        %s359 = smul.addr %s358, 4
        %s360 = scalar_lea.vmem %s1, %s359
        %p361 = scmp.lt.s32.totalorder %s23, 1
        %s362 = scalar_select %p361, %s23, 1
        %s363 = smul.addr %s362, 4
        %s364 = scalar_lea.vmem %s2, %s363
        %v365 = vld [vmem:[%s356] sm:$0xff]
        %v366 = vld [vmem:[%s360] sm:$0xf]
        %v367 = vld [vmem:[%s364] sm:$0xf]
        %v368 = vld [vmem:[%s7] sm:$0xf]
        %v369 = vld [vmem:[%s8] sm:$0xf]
        %v370 = vld [vmem:[%s4] sm:$0xf]
        %v371 = vld [vmem:[%s6] sm:$0xf]
        %v372 = vlaneseq
        %v373 = vand.u32 %v372, 127
        %v374 = vadd.s32 %v373, 128
        %vm375 = vcmp.lt.s32.totalorder %v373, 0
        %v376 = vsub.s32 0, %v373
        %v377 = vsel %vm375, %v376, %v373
        %v378 = vshrl.u32 %v377, 4
        %v379 = vand.u32 %v377, 15
        %v380 = vsub.s32 0, %v379
        %v381 = vsel %vm375, %v380, %v379
        %vm382 = vcmp.lt.s32.totalorder %v374, 0
        %v383 = vsub.s32 0, %v374
        %v384 = vsel %vm382, %v383, %v374
        %v385 = vshrl.u32 %v384, 4
        %v386 = vand.u32 %v384, 15
        %v387 = vsub.s32 0, %v386
        %v388 = vsel %vm382, %v387, %v386
        %vm389 = vcmp.ne.s32.totalorder %v381, 0
        %vm390 = vcmp.ne.s32.totalorder %v388, 0
        %vm391 = vcmp.lt.s32.totalorder %v381, 0
        %vm392 = vcmp.lt.s32.totalorder %v388, 0
        %vm393 = vmand %vm391, %vm389
        %vm394 = vmand %vm392, %vm390
        %v395 = vadd.s32 %v381, 16
        %v396 = vadd.s32 %v388, 16
        %v397 = vsel %vm393, %v395, %v381
        %v398 = vsel %vm394, %v396, %v388
        %vm399 = vcmp.eq.s32.totalorder %v397, 0
        %vm400 = vcmp.eq.s32.totalorder %v398, 0
        %vm401 = vcmp.eq.s32.totalorder %v397, 15
        %vm402 = vcmp.eq.s32.totalorder %v398, 15
        %vm403 = vcmp.lt.s32.totalorder %v373, 16
        %vm404 = vcmp.lt.s32.totalorder %v374, 16
        %vm405 = vcmp.ge.s32.totalorder %v373, 240
        %vm406 = vcmp.ge.s32.totalorder %v374, 240
        %v408 = vcombine.high %v365, %v365
        %410 = vrot.lane.b32.xlu0 %v365, 112
        %v411 = vpop.permute.xlu0 %410
        %412 = vrot.lane.b32.xlu0 %v408, 112
        %v413 = vpop.permute.xlu0 %412
        %vm414 = vcmp.lt.s32.totalorder %v373, 112
        %v415 = vsel %vm414, %v411, %v413
        %v416 = vsel %vm414, %v413, %v411
        %417 = vrot.lane.b32.xlu0 %v365, 16
        %v418 = vpop.permute.xlu0 %417
        %419 = vrot.lane.b32.xlu0 %v408, 16
        %v420 = vpop.permute.xlu0 %419
        %v421 = vsel %vm403, %v418, %v420
        %v422 = vsel %vm403, %v420, %v418
        %v423 = vsel %vm403, 1, 0
        %v424 = vsel %vm404, 1, 0
        %vm425 = vcmp.eq.s32.totalorder %v423, 1
        %vm426 = vcmp.eq.s32.totalorder %v424, 1
        %v427 = vsel %vm425, %v415, %v422
        %v428 = vsel %vm426, %v416, %v421
        %v429 = vsel %vm405, 1, 0
        %v430 = vsel %vm406, 1, 0
        %vm431 = vcmp.eq.s32.totalorder %v429, 1
        %vm432 = vcmp.eq.s32.totalorder %v430, 1
        %v433 = vsel %vm431, %v422, %v415
        %v434 = vsel %vm432, %v421, %v416
        %435 = vrot.lane.b32.xlu0 %v427, 127
        %v436 = vpop.permute.xlu0 %435
        %437 = vrot.lane.b32.xlu0 %v428, 127
        %v438 = vpop.permute.xlu0 %437
        %vm439 = vcmp.lt.s32.totalorder %v373, 127
        %v440 = vsel %vm439, %v436, %v438
        %v441 = vsel %vm439, %v438, %v436
        %442 = vrot.lane.b32.xlu0 %v427, 1
        %v443 = vpop.permute.xlu0 %442
        %444 = vrot.lane.b32.xlu0 %v428, 1
        %v445 = vpop.permute.xlu0 %444
        %vm446 = vcmp.lt.s32.totalorder %v373, 1
        %v447 = vsel %vm446, %v443, %v445
        %v448 = vsel %vm446, %v445, %v443
        %v449 = vsel %vm399, 1, 0
        %v450 = vsel %vm400, 1, 0
        %vm451 = vcmp.eq.s32.totalorder %v449, 1
        %vm452 = vcmp.eq.s32.totalorder %v450, 1
        %v453 = vsel %vm451, %v440, %v448
        %v454 = vsel %vm452, %v441, %v447
        %v455 = vsel %vm401, 1, 0
        %v456 = vsel %vm402, 1, 0
        %vm457 = vcmp.eq.s32.totalorder %v455, 1
        %vm458 = vcmp.eq.s32.totalorder %v456, 1
        %v459 = vsel %vm457, %v448, %v440
        %v460 = vsel %vm458, %v447, %v441
        %461 = vrot.lane.b32.xlu0 %v365, 127
        %v462 = vpop.permute.xlu0 %461
        %463 = vrot.lane.b32.xlu0 %v408, 127
        %v464 = vpop.permute.xlu0 %463
        %v465 = vsel %vm439, %v462, %v464
        %v466 = vsel %vm439, %v464, %v462
        %467 = vrot.lane.b32.xlu0 %v365, 1
        %v468 = vpop.permute.xlu0 %467
        %469 = vrot.lane.b32.xlu0 %v408, 1
        %v470 = vpop.permute.xlu0 %469
        %v471 = vsel %vm446, %v468, %v470
        %v472 = vsel %vm446, %v470, %v468
        %v473 = vsel %vm451, %v465, %v472
        %v474 = vsel %vm452, %v466, %v471
        %v475 = vsel %vm457, %v472, %v465
        %v476 = vsel %vm458, %v471, %v466
        %477 = vrot.lane.b32.xlu0 %v433, 127
        %v478 = vpop.permute.xlu0 %477
        %479 = vrot.lane.b32.xlu0 %v434, 127
        %v480 = vpop.permute.xlu0 %479
        %v481 = vsel %vm439, %v478, %v480
        %v482 = vsel %vm439, %v480, %v478
        %483 = vrot.lane.b32.xlu0 %v433, 1
        %v484 = vpop.permute.xlu0 %483
        %485 = vrot.lane.b32.xlu0 %v434, 1
        %v486 = vpop.permute.xlu0 %485
        %v487 = vsel %vm446, %v484, %v486
        %v488 = vsel %vm446, %v486, %v484
        %v489 = vsel %vm451, %v481, %v488
        %v490 = vsel %vm452, %v482, %v487
        %v491 = vsel %vm457, %v488, %v481
        %v492 = vsel %vm458, %v487, %v482
        %v495 = vrot.slane %v427, 4
        %v496 = vrot.slane %v428, 4
        %v501 = vrot.slane %v473, 4
        %v502 = vrot.slane %v474, 4
        %v507 = vrot.slane %v475, 4
        %v508 = vrot.slane %v476, 4
        %v513 = vrot.slane %v433, 4
        %v514 = vrot.slane %v434, 4
        %vm517 = vcmask 1043456
        %v518 = vsel %vm517, %v453, %v495
        %v519 = vsel %vm517, %v454, %v496
        %v520 = vsel %vm517, %v459, %v501
        %v521 = vsel %vm517, %v460, %v502
        %v522 = vsel %vm517, %v365, %v507
        %v523 = vsel %vm517, %v408, %v508
        %v524 = vsel %vm517, %v489, %v513
        %v525 = vsel %vm517, %v490, %v514
        %v526 = vld [vmem:[%s3] sm:$0xf]
        %vm527 = vcmask 293888
        %v529 = vsel %vm527, %v526, 0
        %v532 = vsel %vm517, %v491, 0
        %v535 = vsel %vm517, %v492, 0
        %537 = vmatprep.subr.mxu0 %v519
        %538 = vmatpush1.msra.mxu0 %v518
        %539 = vmatprep.subr.mxu0 %v521
        %540 = vmatpush1.msra.mxu0 %v520
        %541 = vmatprep.subr.mxu0 %v523
        %542 = vmatpush1.msra.mxu0 %v522
        %543 = vmatprep.subr.mxu0 %v525
        %544 = vmatpush1.msra.mxu0 %v524
        %545 = vmatprep.subr.mxu0 %v535
        %546 = vmatpush1.msra.mxu0 %v532
        %547 = vmatprep.subr.mxu0 0.0
        %548 = vmatpush1.msra.mxu0 0.0
        %549 = vmatprep.subr.mxu0 0.0
        %550 = vmatpush1.msra.mxu0 0.0
        %551 = vmatprep.subr.mxu0 0.0
        %552 = vmatpush1.msra.mxu0 0.0
        %553 = vmatprep.subr.mxu0 0.0
        %554 = vmatpush1.msra.mxu0 0.0
        %555 = vmatprep.subr.mxu0 0.0
        %556 = vmatpush1.msra.mxu0 0.0
        %557 = vmatprep.subr.mxu0 0.0
        %558 = vmatpush1.msra.mxu0 0.0
        %559 = vmatprep.subr.mxu0 0.0
        %560 = vmatpush1.msra.mxu0 0.0
        %561 = vmatprep.subr.mxu0 0.0
        %562 = vmatpush1.msra.mxu0 0.0
        %563 = vmatprep.subr.mxu0 0.0
        %564 = vmatpush1.msra.mxu0 0.0
        %565 = vmatprep.subr.mxu0 0.0
        %566 = vmatpush1.msra.mxu0 0.0
        %567 = vmatprep.subr.mxu0 0.0
        %568 = vmatpush1.msra.mxu0 0.0
        %569 = vmatprep.subr.mxu0 0.0
        %570 = vmatpush1.msra.mxu0 0.0
        %571 = vmatprep.subr.mxu0 0.0
        %572 = vmatpush1.msra.mxu0 0.0
        %573 = vmatprep.subr.mxu0 0.0
        %574 = vmatpush1.msra.mxu0 0.0
        %575 = vmatprep.subr.mxu0 0.0
        %576 = vmatpush1.msra.mxu0 0.0
        %577 = vmatprep.subr.mxu0 0.0
        %578 = vmatpush1.msra.mxu0 0.0
        %579 = vmatprep.subr.mxu0 0.0
        %580 = vmatpush1.msra.mxu0 0.0
        %581 = vmatprep.subr.mxu0 0.0
        %582 = vmatpush1.msra.mxu0 0.0
        %583 = vmatprep.subr.mxu0 0.0
        %584 = vmatpush1.msra.mxu0 0.0
        %585 = vmatprep.subr.mxu0 0.0
        %586 = vmatpush1.msra.mxu0 0.0
        %587 = vmatprep.subr.mxu0 0.0
        %588 = vmatpush1.msra.mxu0 0.0
        %589 = vmatprep.subr.mxu0 0.0
        %590 = vmatpush1.msra.mxu0 0.0
        %591 = vmatprep.subr.mxu0 0.0
        %592 = vmatpush1.msra.mxu0 0.0
        %593 = vmatprep.subr.mxu0 0.0
        %594 = vmatpush1.msra.mxu0 0.0
        %595 = vmatprep.subr.mxu0 0.0
        %596 = vmatpush1.msra.mxu0 0.0
        %597 = vmatprep.subr.mxu0 0.0
        %598 = vmatpush1.msra.mxu0 0.0
        %599 = vmatprep.subr.mxu0 0.0
        %600 = vmatpush1.msra.mxu0 0.0
        %601 = vmatprep.mubr.f32.mxu0 0.0
        %602 = vmatmul.mubr.f32.gmra.mrb[0].mxu0 %v529
        %v603 = vpop.f32.mrb[0].mxu0
        %v604 = vadd.f32 0.0, %v603
        %v605 = vpop.f32.mrb[0].mxu0
        %v606 = vadd.f32 0.0, %v605
        %607 = vdwg.mxu0
        %v608 = vsel %vm517, %v604, 0.0
        %v609 = vsel %vm517, %v606, 0.0
        %v610 = vadd.f32 %v608, %v609
        %611 = vadd.xlane.f32.xlu0 %v610
        %v612 = vpop.xlane.xlu0 %611
        %v613 = vmul.f32 %v612, 0.00390625
        %v614 = vsub.f32 %v604, %v613
        %v615 = vsub.f32 %v606, %v613
        %v616 = vmul.f32 %v614, %v614
        %v617 = vmul.f32 %v615, %v615
        %v618 = vsel %vm517, %v616, 0.0
        %v619 = vsel %vm517, %v617, 0.0
        %v620 = vadd.f32 %v618, %v619
        %621 = vadd.xlane.f32.xlu0 %v620
        %v622 = vpop.xlane.xlu0 %621
        %v623 = vmul.f32 %v622, 0.003921569
        %v624 = vadd.f32 %v623, 1e-05
        %v625 = vrsqrt.pop %v624
        %v626 = vadd.f32 %v613, %v370
        %vm627 = vcmask 3072
        %v628 = vsel %vm627, %v626, 0.0
        %629 = vadd.xlane.f32.xlu0 %v628
        %v630 = vpop.xlane.xlu0 %629
        %v631 = vrot.slane %v630, 4
        %v632 = vadd.f32 %v630, %v631
        %v633 = vrot.slane %v632, 2
        %v634 = vadd.f32 %v632, %v633
        %v635 = vrot.slane %v634, 1
        %v636 = vadd.f32 %v634, %v635
        %s637 = vtos %v636
        %s638 = smul.f32 %s637, 0.25
        %v639 = vstv %s638
        %v640 = vsub.f32 %v626, %v639
        %v641 = vsel %vm627, %v622, 0.0
        %642 = vadd.xlane.f32.xlu0 %v641
        %v643 = vpop.xlane.xlu0 %642
        %v644 = vrot.slane %v643, 4
        %v645 = vadd.f32 %v643, %v644
        %v646 = vrot.slane %v645, 2
        %v647 = vadd.f32 %v645, %v646
        %v648 = vrot.slane %v647, 1
        %v649 = vadd.f32 %v647, %v648
        %s650 = vtos %v649
        %v651 = vmul.f32 %v640, %v640
        %v652 = vsel %vm627, %v651, 0.0
        %653 = vadd.xlane.f32.xlu0 %v652
        %v654 = vpop.xlane.xlu0 %653
        %v655 = vrot.slane %v654, 4
        %v656 = vadd.f32 %v654, %v655
        %v657 = vrot.slane %v656, 2
        %v658 = vadd.f32 %v656, %v657
        %v659 = vrot.slane %v658, 1
        %v660 = vadd.f32 %v658, %v659
        %s661 = vtos %v660
        %s662 = smul.f32 %s661, 256.0
        %s663 = sadd.f32 %s650, %s662
        %s664 = smul.f32 %s663, 0.0009775171
        %s665 = sadd.f32 %s664, 1e-05
        %v666 = vstv %s665
        %v667 = vrsqrt.pop %v666
        %s668 = vtos %v667
        %v669 = vmul.f32 %v368, %v625
        %v670 = vsub.f32 1.0, %v368
        %v671 = vstv %s668
        %v672 = vmul.f32 %v670, %v671
        %v673 = vadd.f32 %v669, %v672
        %v674 = vmul.f32 %v669, %v626
        %v675 = vmul.f32 %v672, %v639
        %v676 = vadd.f32 %v674, %v675
        %v677 = vmul.f32 %v366, %v673
        %v678 = vmul.f32 %v366, %v676
        %v679 = vsub.f32 %v367, %v678
        %v680 = vmul.f32 %v370, %v677
        %v681 = vadd.f32 %v679, %v680
        %683 = vset.pattern.permute.xlu0 0
        %684 = vperm.xlu0 %683, %v677
        %v685 = vpop.permute.xlu0 %684
        %v687 = vmul.f32 %v604, %v685
        %v688 = vmul.f32 %v606, %v685
        %690 = vset.pattern.permute.xlu0 0
        %691 = vperm.xlu0 %690, %v681
        %v692 = vpop.permute.xlu0 %691
        %v694 = vadd.f32 %v687, %v692
        %v695 = vadd.f32 %v688, %v692
        %v696 = vmax.f32 %v694, 0.0
        %v697 = vmax.f32 %v695, 0.0
        %698 = vrot.lane.b32.xlu0 %v696, 112
        %v699 = vpop.permute.xlu0 %698
        %700 = vrot.lane.b32.xlu0 %v697, 112
        %v701 = vpop.permute.xlu0 %700
        %v702 = vsel %vm414, %v699, %v701
        %v703 = vsel %vm414, %v701, %v699
        %704 = vrot.lane.b32.xlu0 %v696, 16
        %v705 = vpop.permute.xlu0 %704
        %706 = vrot.lane.b32.xlu0 %v697, 16
        %v707 = vpop.permute.xlu0 %706
        %v708 = vsel %vm403, %v705, %v707
        %v709 = vsel %vm403, %v707, %v705
        %v710 = vsel %vm425, %v702, %v709
        %v711 = vsel %vm426, %v703, %v708
        %v712 = vsel %vm431, %v709, %v702
        %v713 = vsel %vm432, %v708, %v703
        %714 = vrot.lane.b32.xlu0 %v710, 127
        %v715 = vpop.permute.xlu0 %714
        %716 = vrot.lane.b32.xlu0 %v711, 127
        %v717 = vpop.permute.xlu0 %716
        %v718 = vsel %vm439, %v715, %v717
        %v719 = vsel %vm439, %v717, %v715
        %720 = vrot.lane.b32.xlu0 %v710, 1
        %v721 = vpop.permute.xlu0 %720
        %722 = vrot.lane.b32.xlu0 %v711, 1
        %v723 = vpop.permute.xlu0 %722
        %v724 = vsel %vm446, %v721, %v723
        %v725 = vsel %vm446, %v723, %v721
        %v726 = vsel %vm451, %v718, %v725
        %v727 = vsel %vm452, %v719, %v724
        %v728 = vsel %vm457, %v725, %v718
        %v729 = vsel %vm458, %v724, %v719
        %730 = vrot.lane.b32.xlu0 %v696, 127
        %v731 = vpop.permute.xlu0 %730
        %732 = vrot.lane.b32.xlu0 %v697, 127
        %v733 = vpop.permute.xlu0 %732
        %v734 = vsel %vm439, %v731, %v733
        %v735 = vsel %vm439, %v733, %v731
        %736 = vrot.lane.b32.xlu0 %v696, 1
        %v737 = vpop.permute.xlu0 %736
        %738 = vrot.lane.b32.xlu0 %v697, 1
        %v739 = vpop.permute.xlu0 %738
        %v740 = vsel %vm446, %v737, %v739
        %v741 = vsel %vm446, %v739, %v737
        %v742 = vsel %vm451, %v734, %v741
        %v743 = vsel %vm452, %v735, %v740
        %v744 = vsel %vm457, %v741, %v734
        %v745 = vsel %vm458, %v740, %v735
        %746 = vrot.lane.b32.xlu0 %v712, 127
        %v747 = vpop.permute.xlu0 %746
        %748 = vrot.lane.b32.xlu0 %v713, 127
        %v749 = vpop.permute.xlu0 %748
        %v750 = vsel %vm439, %v747, %v749
        %v751 = vsel %vm439, %v749, %v747
        %752 = vrot.lane.b32.xlu0 %v712, 1
        %v753 = vpop.permute.xlu0 %752
        %754 = vrot.lane.b32.xlu0 %v713, 1
        %v755 = vpop.permute.xlu0 %754
        %v756 = vsel %vm446, %v753, %v755
        %v757 = vsel %vm446, %v755, %v753
        %v758 = vsel %vm451, %v750, %v757
        %v759 = vsel %vm452, %v751, %v756
        %v760 = vsel %vm457, %v757, %v750
        %v761 = vsel %vm458, %v756, %v751
        %v764 = vrot.slane %v710, 4
        %v765 = vrot.slane %v711, 4
        %v770 = vrot.slane %v742, 4
        %v771 = vrot.slane %v743, 4
        %v776 = vrot.slane %v744, 4
        %v777 = vrot.slane %v745, 4
        %v782 = vrot.slane %v712, 4
        %v783 = vrot.slane %v713, 4
        %v786 = vsel %vm517, %v726, %v764
        %v787 = vsel %vm517, %v727, %v765
        %v788 = vsel %vm517, %v728, %v770
        %v789 = vsel %vm517, %v729, %v771
        %v790 = vsel %vm517, %v696, %v776
        %v791 = vsel %vm517, %v697, %v777
        %v792 = vsel %vm517, %v758, %v782
        %v793 = vsel %vm517, %v759, %v783
        %v794 = vld [vmem:[%s5] sm:$0xf]
        %v796 = vsel %vm527, %v794, 0
        %v799 = vsel %vm517, %v760, 0
        %v802 = vsel %vm517, %v761, 0
        %804 = vmatprep.subr.mxu0 %v787
        %805 = vmatpush1.msra.mxu0 %v786
        %806 = vmatprep.subr.mxu0 %v789
        %807 = vmatpush1.msra.mxu0 %v788
        %808 = vmatprep.subr.mxu0 %v791
        %809 = vmatpush1.msra.mxu0 %v790
        %810 = vmatprep.subr.mxu0 %v793
        %811 = vmatpush1.msra.mxu0 %v792
        %812 = vmatprep.subr.mxu0 %v802
        %813 = vmatpush1.msra.mxu0 %v799
        %814 = vmatprep.subr.mxu0 0.0
        %815 = vmatpush1.msra.mxu0 0.0
        %816 = vmatprep.subr.mxu0 0.0
        %817 = vmatpush1.msra.mxu0 0.0
        %818 = vmatprep.subr.mxu0 0.0
        %819 = vmatpush1.msra.mxu0 0.0
        %820 = vmatprep.subr.mxu0 0.0
        %821 = vmatpush1.msra.mxu0 0.0
        %822 = vmatprep.subr.mxu0 0.0
        %823 = vmatpush1.msra.mxu0 0.0
        %824 = vmatprep.subr.mxu0 0.0
        %825 = vmatpush1.msra.mxu0 0.0
        %826 = vmatprep.subr.mxu0 0.0
        %827 = vmatpush1.msra.mxu0 0.0
        %828 = vmatprep.subr.mxu0 0.0
        %829 = vmatpush1.msra.mxu0 0.0
        %830 = vmatprep.subr.mxu0 0.0
        %831 = vmatpush1.msra.mxu0 0.0
        %832 = vmatprep.subr.mxu0 0.0
        %833 = vmatpush1.msra.mxu0 0.0
        %834 = vmatprep.subr.mxu0 0.0
        %835 = vmatpush1.msra.mxu0 0.0
        %836 = vmatprep.subr.mxu0 0.0
        %837 = vmatpush1.msra.mxu0 0.0
        %838 = vmatprep.subr.mxu0 0.0
        %839 = vmatpush1.msra.mxu0 0.0
        %840 = vmatprep.subr.mxu0 0.0
        %841 = vmatpush1.msra.mxu0 0.0
        %842 = vmatprep.subr.mxu0 0.0
        %843 = vmatpush1.msra.mxu0 0.0
        %844 = vmatprep.subr.mxu0 0.0
        %845 = vmatpush1.msra.mxu0 0.0
        %846 = vmatprep.subr.mxu0 0.0
        %847 = vmatpush1.msra.mxu0 0.0
        %848 = vmatprep.subr.mxu0 0.0
        %849 = vmatpush1.msra.mxu0 0.0
        %850 = vmatprep.subr.mxu0 0.0
        %851 = vmatpush1.msra.mxu0 0.0
        %852 = vmatprep.subr.mxu0 0.0
        %853 = vmatpush1.msra.mxu0 0.0
        %854 = vmatprep.subr.mxu0 0.0
        %855 = vmatpush1.msra.mxu0 0.0
        %856 = vmatprep.subr.mxu0 0.0
        %857 = vmatpush1.msra.mxu0 0.0
        %858 = vmatprep.subr.mxu0 0.0
        %859 = vmatpush1.msra.mxu0 0.0
        %860 = vmatprep.subr.mxu0 0.0
        %861 = vmatpush1.msra.mxu0 0.0
        %862 = vmatprep.subr.mxu0 0.0
        %863 = vmatpush1.msra.mxu0 0.0
        %864 = vmatprep.subr.mxu0 0.0
        %865 = vmatpush1.msra.mxu0 0.0
        %866 = vmatprep.subr.mxu0 0.0
        %867 = vmatpush1.msra.mxu0 0.0
        %868 = vmatprep.mubr.f32.mxu0 0.0
        %869 = vmatmul.mubr.f32.gmra.mrb[0].mxu0 %v796
        %v870 = vpop.f32.mrb[0].mxu0
        %v871 = vadd.f32 0.0, %v870
        %v872 = vpop.f32.mrb[0].mxu0
        %v873 = vadd.f32 0.0, %v872
        %874 = vdwg.mxu0
        %v875 = vsel %vm517, %v871, 0.0
        %v876 = vsel %vm517, %v873, 0.0
        %v877 = vadd.f32 %v875, %v876
        %878 = vadd.xlane.f32.xlu0 %v877
        %v879 = vpop.xlane.xlu0 %878
        %v880 = vmul.f32 %v879, 0.00390625
        %v881 = vsub.f32 %v871, %v880
        %v882 = vsub.f32 %v873, %v880
        %v883 = vmul.f32 %v881, %v881
        %v884 = vmul.f32 %v882, %v882
        %v885 = vsel %vm517, %v883, 0.0
        %v886 = vsel %vm517, %v884, 0.0
        %v887 = vadd.f32 %v885, %v886
        %888 = vadd.xlane.f32.xlu0 %v887
        %v889 = vpop.xlane.xlu0 %888
        %v890 = vmul.f32 %v889, 0.003921569
        %v891 = vadd.f32 %v890, 1e-05
        %v892 = vrsqrt.pop %v891
        %v893 = vadd.f32 %v880, %v371
        %v894 = vsel %vm627, %v893, 0.0
        %895 = vadd.xlane.f32.xlu0 %v894
        %v896 = vpop.xlane.xlu0 %895
        %v897 = vrot.slane %v896, 4
        %v898 = vadd.f32 %v896, %v897
        %v899 = vrot.slane %v898, 2
        %v900 = vadd.f32 %v898, %v899
        %v901 = vrot.slane %v900, 1
        %v902 = vadd.f32 %v900, %v901
        %s903 = vtos %v902
        %s904 = smul.f32 %s903, 0.25
        %v905 = vstv %s904
        %v906 = vsub.f32 %v893, %v905
        %v907 = vsel %vm627, %v889, 0.0
        %908 = vadd.xlane.f32.xlu0 %v907
        %v909 = vpop.xlane.xlu0 %908
        %v910 = vrot.slane %v909, 4
        %v911 = vadd.f32 %v909, %v910
        %v912 = vrot.slane %v911, 2
        %v913 = vadd.f32 %v911, %v912
        %v914 = vrot.slane %v913, 1
        %v915 = vadd.f32 %v913, %v914
        %s916 = vtos %v915
        %v917 = vmul.f32 %v906, %v906
        %v918 = vsel %vm627, %v917, 0.0
        %919 = vadd.xlane.f32.xlu0 %v918
        %v920 = vpop.xlane.xlu0 %919
        %v921 = vrot.slane %v920, 4
        %v922 = vadd.f32 %v920, %v921
        %v923 = vrot.slane %v922, 2
        %v924 = vadd.f32 %v922, %v923
        %v925 = vrot.slane %v924, 1
        %v926 = vadd.f32 %v924, %v925
        %s927 = vtos %v926
        %s928 = smul.f32 %s927, 256.0
        %s929 = sadd.f32 %s916, %s928
        %s930 = smul.f32 %s929, 0.0009775171
        %s931 = sadd.f32 %s930, 1e-05
        %v932 = vstv %s931
        %v933 = vrsqrt.pop %v932
        %s934 = vtos %v933
        %v935 = vmul.f32 %v369, %v892
        %v936 = vsub.f32 1.0, %v369
        %v937 = vstv %s934
        %v938 = vmul.f32 %v936, %v937
        %v939 = vadd.f32 %v935, %v938
        %v940 = vmul.f32 %v935, %v893
        %v941 = vmul.f32 %v938, %v905
        %v942 = vadd.f32 %v940, %v941
        %v943 = vmul.f32 %v366, %v939
        %v944 = vmul.f32 %v366, %v942
        %v945 = vsub.f32 %v367, %v944
        %v946 = vmul.f32 %v371, %v943
        %v947 = vadd.f32 %v945, %v946
        %949 = vset.pattern.permute.xlu0 0
        %950 = vperm.xlu0 %949, %v943
        %v951 = vpop.permute.xlu0 %950
        %v953 = vmul.f32 %v871, %v951
        %v954 = vmul.f32 %v873, %v951
        %956 = vset.pattern.permute.xlu0 0
        %957 = vperm.xlu0 %956, %v947
        %v958 = vpop.permute.xlu0 %957
        %v960 = vadd.f32 %v953, %v958
        %v961 = vadd.f32 %v954, %v958
        %v962 = vadd.f32 %v960, %v365
        %v963 = vadd.f32 %v961, %v408
        %v966 = vcombine.low %v962, %v963
        %968 = vst [vmem:[%s351] sm:$0xff] %v966
        %s969 = sand.u32 %s235, 1
        %s970 = scalar_lea.sflag [#allocation3], %s969
        %s971 = sand.u32 %s235, 1
        %s972 = smul.addr %s971, 8
        %s973 = scalar_lea.vmem [#allocation2], %s972
        // Predicated region
        $region57: #{tpu_custom_call.1} parent=55 // pred_check
          %p974 = pneg %p245
        $region58: #{tpu_custom_call.1} parent=55 // pred_check_branch
          %976 = sbr.rel (%p974) target = $region60
        $region59: #{tpu_custom_call.1} parent=55 // pred_region
          %s978 = ssub.s32 128, 128
          %979 = vsyncadd %s970, %s978
          %s980 = smul.addr %s23, 2
          %s981 = smul.addr %s980, 64
          %s982 = scalar_lea.hbm %s9, %s981
          %s984 = sshll.u32 %s973, 4
          %s985 = int_to_ptr.vmem [resolvable:$true] %s984
          %987 = dma.vmem_to_hbm [thread:$0]  %s985, 128, %s982, %s970
        $region60: #{tpu_custom_call.1} parent=55 // pred_fallthru
          _
      $region56: #{tpu_custom_call.1} parent=5 // pred_fallthru
        _
      %p988 = scmp.le.s32.totalorder 2, %s18
      // Predicated region
      $region61: #{tpu_custom_call.1} parent=5 // pred_check
        %p989 = pneg %p988
      $region62: #{tpu_custom_call.1} parent=5 // pred_check_branch
        %991 = sbr.rel (%p989) target = $region64
      $region63: #{tpu_custom_call.1} parent=5 // pred_region
        %s992 = ssub.s32 %s18, 2
        // Predicated region
        $region65: #{tpu_custom_call.1} parent=63 // pred_check
          %p993 = pneg %p251
        $region66: #{tpu_custom_call.1} parent=63 // pred_check_branch
          %995 = sbr.rel (%p993) target = $region68
        $region67: #{tpu_custom_call.1} parent=63 // pred_region
          %s996 = sand.u32 %s236, 1
          %s997 = scalar_lea.sflag [#allocation3], %s996
          %s998 = sand.u32 %s236, 1
          %s999 = smul.addr %s998, 8
          %s1000 = scalar_lea.vmem [#allocation2], %s999
          %1001 = dma.done %s997, 128
        $region68: #{tpu_custom_call.1} parent=63 // pred_fallthru
          _
      $region64: #{tpu_custom_call.1} parent=5 // pred_fallthru
        _
    $region6: #{tpu_custom_call.1} parent=1 // loop_footer
      %s22 = sadd.s32 1, %s18
    $region7: #{tpu_custom_call.1} parent=1 // loop_footer_branch
      %17 = sbr.rel target = $region3
    $region8: #{tpu_custom_call.1} parent=1 // loop_exit
      _
    %1002 = vsyncpa [#allocation3], 1
    %s1003 = scalar_lea.sflag [#allocation3], 1
    %1004 = vsyncpa %s1003, 1

</llo_original>
